<compile_context>
chip_gen: v7x
topology: tpu7x:2x2x1
jax: 0.10.0
libtpu: 0.0.40
codegen_flags: <defaults>
</compile_context>

<pallas_src>
import functools

import jax
import jax.numpy as jnp
from jax import lax
from jax.experimental import pallas as pl
from jax.experimental.pallas import tpu as pltpu


_N_OUT = 2       # the module's final Linear maps nkernel -> 2
_N_OUT_PAD = 8   # pad to one full sublane group -> fully unmasked (8, tm) output stores


def mlp_output_kernel(x_ref, w1_ref, b1_ref, w2t_ref, b2t_ref, ot_ref):
    """Fused head: Linear(dim->nkernel) -> ReLU -> Linear(nkernel->2), emitted transposed."""
    x = x_ref[...]                                            # (tm, dim)

    # Layer 0: x @ W1 + b1, ReLU.  f32 accumulation on the MXU.
    h = jnp.dot(x, w1_ref[...], preferred_element_type=jnp.float32)
    h = jnp.maximum(h + b1_ref[...], 0.0)                     # (tm, nkernel) f32

    # Final layer, computed transposed for a lane-dense output tile:
    #   out_t[o, m] = sum_k W2t[o, k] * h[m, k]
    # rhs contracts on its last dim (the q @ k.T pattern) -> no materialized
    # transpose of h.  Cast h to W2's dtype (bf16 when the caller passes bf16
    # weights) so the MXU stays on the single-pass bf16 path; accumulate in f32.
    w2t = w2t_ref[...]
    out_t = lax.dot_general(
        w2t, h.astype(w2t.dtype),
        dimension_numbers=(((1,), (1,)), ((), ())),
        preferred_element_type=jnp.float32)                   # (n_out_pad, tm)
    out_t = out_t + b2t_ref[...]                              # b2t is (n_out_pad, 1)
    ot_ref[...] = out_t.astype(ot_ref.dtype)


def _choose_tile_m(M, tile_m):
    """Pick a legal batch tile.

    - tiny M: one full block (block dims == full array dims, always legal);
    - otherwise a 128-multiple (lane-dense output, x sublane alignment), capped
      so the grid has >= 2 blocks -> v7x's second TensorCore picks up blocks via
      dimension_semantics=('parallel',).  Harmless on v5e/v6e.
    """
    if M <= 256:
        return M
    half = max(128, (((M + 1) // 2) // 128) * 128)   # round_down(cdiv(M, 2), 128)
    tm = min(tile_m, half)
    return max(128, (tm // 128) * 128)


def prepare_params(w1, b1, w2, b2):
    """One-time packing of (transposed-PyTorch-layout) params into kernel layout.

    w1 : (dim, nkernel)   b1 : (nkernel,)   w2 : (nkernel, 2)   b2 : (2,)
    Hoisted out of the per-call path so the tiny pad/reshape ops run once.
    """
    dim, nkernel = w1.shape
    n_out = w2.shape[1]
    assert n_out == _N_OUT
    b1_2d = jnp.asarray(b1, jnp.float32).reshape(1, nkernel)
    w2t = jnp.zeros((_N_OUT_PAD, nkernel), w2.dtype).at[:n_out].set(w2.T)
    b2t = jnp.zeros((_N_OUT_PAD, 1), jnp.float32).at[:n_out, 0].set(
        jnp.asarray(b2, jnp.float32))
    return (w1, b1_2d, w2t, b2t)


@functools.partial(jax.jit, static_argnames=("tile_m",))
def output_forward(x, params, *, tile_m=4096):
    """Forward pass of the `output` module (nlayers=1).  Returns (M, 2) in x.dtype."""
    w1, b1_2d, w2t, b2t = params
    M, dim = x.shape
    dim_w, nkernel = w1.shape
    assert dim_w == dim
    assert w2t.shape == (_N_OUT_PAD, nkernel)

    tm = _choose_tile_m(M, tile_m)
    grid = (pl.cdiv(M, tm),)

    itemsize = jnp.dtype(x.dtype).itemsize
    w_itemsize = jnp.dtype(w1.dtype).itemsize
    flops = 2 * M * dim * nkernel + 2 * M * nkernel * _N_OUT_PAD
    bytes_accessed = (
        M * dim * itemsize                                   # x (dominant stream)
        + dim * nkernel * w_itemsize                         # W1 (resident)
        + nkernel * 4                                        # b1
        + _N_OUT_PAD * nkernel * jnp.dtype(w2t.dtype).itemsize
        + _N_OUT_PAD * 4                                     # b2
        + _N_OUT_PAD * M * itemsize                          # transposed output
    )

    # VMEM estimate: double-buffered x tile + f32 hidden temp + double-buffered
    # transposed output tile + resident weights.  Only raise the scoped-VMEM
    # limit when the v5e 16 MiB default would be tight (not at default sizes).
    vmem_needed = (
        2 * tm * dim * itemsize
        + tm * nkernel * 4
        + 2 * _N_OUT_PAD * tm * itemsize
        + dim * nkernel * w_itemsize
        + _N_OUT_PAD * nkernel * jnp.dtype(w2t.dtype).itemsize
    )
    compiler_kwargs = {}
    if vmem_needed > 12 * 1024 * 1024:
        compiler_kwargs["vmem_limit_bytes"] = int(min(2 * vmem_needed, 48 * 1024 * 1024))

    out_t = pl.pallas_call(
        mlp_output_kernel,
        out_shape=jax.ShapeDtypeStruct((_N_OUT_PAD, M), x.dtype),
        grid=grid,
        in_specs=[
            pl.BlockSpec((tm, dim), lambda i: (i, 0)),              # x: streamed over batch
            pl.BlockSpec((dim, nkernel), lambda i: (0, 0)),         # W1 (resident)
            pl.BlockSpec((1, nkernel), lambda i: (0, 0)),           # b1
            pl.BlockSpec((_N_OUT_PAD, nkernel), lambda i: (0, 0)),  # W2^T, row-padded
            pl.BlockSpec((_N_OUT_PAD, 1), lambda i: (0, 0)),        # b2 column, padded
        ],
        out_specs=pl.BlockSpec((_N_OUT_PAD, tm), lambda i: (0, i)), # lane-dense output
        compiler_params=pltpu.CompilerParams(
            dimension_semantics=("parallel",), **compiler_kwargs),  # megacore over batch blocks
        cost_estimate=pl.CostEstimate(
            flops=flops, transcendentals=0, bytes_accessed=bytes_accessed),
    )(x, w1, b1_2d, w2t, b2t)

    # Undo row padding + transposed layout; fuses under jit (tiny (8, M) slab).
    return out_t[:_N_OUT].T


def init_params(key, dim, nkernel):
    """Deterministic init mirroring nn.Linear's uniform(-1/sqrt(fan_in), 1/sqrt(fan_in))."""
    k1, k2, k3, k4 = jax.random.split(key, 4)
    bound1 = 1.0 / jnp.sqrt(dim)
    w1 = jax.random.uniform(k1, (dim, nkernel), jnp.float32, -bound1, bound1)
    b1 = jax.random.uniform(k2, (nkernel,), jnp.float32, -bound1, bound1)
    bound2 = 1.0 / jnp.sqrt(nkernel)
    w2 = jax.random.uniform(k3, (nkernel, 2), jnp.float32, -bound2, bound2)
    b2 = jax.random.uniform(k4, (2,), jnp.float32, -bound2, bound2)
    return w1, b1, w2, b2


if __name__ == "__main__":
    # Module defaults dim=128, nkernel=128; small batch for the demo.
    dim, nkernel, batch = 128, 128, 256

    key = jax.random.PRNGKey(0)
    kx, kp = jax.random.split(key)
    x = jax.random.normal(kx, (batch, dim), jnp.float32)
    w1, b1, w2, b2 = init_params(kp, dim, nkernel)

    params_f32 = prepare_params(w1, b1, w2, b2)
    ref = jnp.maximum(x @ w1 + b1, 0.0) @ w2 + b2

    # 1) Default path (single block since batch <= 256).
    out = jax.block_until_ready(output_forward(x, params_f32))
    assert out.shape == (batch, 2)
    assert jnp.allclose(out, ref, atol=1e-5, rtol=1e-5), "mismatch (f32, single block)"

    # 2) Multi-block path with a ragged final tile (exercises edge masking + >=2 blocks).
    x2 = jax.random.normal(jax.random.PRNGKey(1), (300, dim), jnp.float32)
    ref2 = jnp.maximum(x2 @ w1 + b1, 0.0) @ w2 + b2
    out2 = jax.block_until_ready(output_forward(x2, params_f32, tile_m=128))
    assert out2.shape == (300, 2)
    assert jnp.allclose(out2, ref2, atol=1e-5, rtol=1e-5), "mismatch (f32, multi block)"

    # 3) >=2-block cap path at default tile_m (M=512 -> tm=256, grid=2).
    x3 = jax.random.normal(jax.random.PRNGKey(2), (512, dim), jnp.float32)
    ref3 = jnp.maximum(x3 @ w1 + b1, 0.0) @ w2 + b2
    out3 = jax.block_until_ready(output_forward(x3, params_f32))
    assert out3.shape == (512, 2)
    assert jnp.allclose(out3, ref3, atol=1e-5, rtol=1e-5), "mismatch (f32, 2-block cap)"

    # 4) bf16 inputs/weights (halves the dominant x HBM read; h cast bf16 before the
    #    second matmul; all accumulation stays f32) -> looser tolerance.
    params_bf16 = prepare_params(w1.astype(jnp.bfloat16), b1,
                                 w2.astype(jnp.bfloat16), b2)
    out_bf16 = jax.block_until_ready(
        output_forward(x.astype(jnp.bfloat16), params_bf16))
    assert jnp.allclose(out_bf16.astype(jnp.float32), ref, atol=5e-2, rtol=5e-2), \
        "mismatch (bf16 inputs)"

    # TODO(synk): optional fp8 (e4m3) x/W1 path on v7x for a further ~2x on the x stream.
    print("KERNEL_OK")
</pallas_src>

<mosaic_0001>
module attributes {stable_mosaic.version = 11 : i64} {
  func.func @mlp_output_kernel(%arg0: i32, %arg1: memref<256x128xf32, #tpu.memory_space<vmem>>, %arg2: memref<128x128xf32, #tpu.memory_space<vmem>>, %arg3: memref<1x128xf32, #tpu.memory_space<vmem>>, %arg4: memref<8x128xf32, #tpu.memory_space<vmem>>, %arg5: memref<8x1xf32, #tpu.memory_space<vmem>>, %arg6: memref<8x256xf32, #tpu.memory_space<vmem>>) attributes {dimension_semantics = [#tpu.dimension_semantics<parallel>], iteration_bounds = array<i64: 1>, scalar_prefetch = 0 : i64, scratch_operands = 0 : i64, tpu.core_type = #tpu.core_type<tc>, window_params = [{transform_indices = @transform_0, window_bounds = array<i64: 256, 128>}, {pipeline_mode = #tpu.pipeline_mode<synchronous>, transform_indices = @transform_1, window_bounds = array<i64: 128, 128>}, {pipeline_mode = #tpu.pipeline_mode<synchronous>, transform_indices = @transform_2, window_bounds = array<i64: 1, 128>}, {pipeline_mode = #tpu.pipeline_mode<synchronous>, transform_indices = @transform_3, window_bounds = array<i64: 8, 128>}, {pipeline_mode = #tpu.pipeline_mode<synchronous>, transform_indices = @transform_4, window_bounds = array<i64: 8, 1>}, {transform_indices = @transform_5, window_bounds = array<i64: 8, 256>}]} {
    %c0 = arith.constant 0 : index
    %c0_0 = arith.constant 0 : index
    %0 = vector.load %arg1[%c0, %c0_0] : memref<256x128xf32, #tpu.memory_space<vmem>>, vector<256x128xf32>
    %c0_1 = arith.constant 0 : index
    %c0_2 = arith.constant 0 : index
    %1 = vector.load %arg2[%c0_1, %c0_2] : memref<128x128xf32, #tpu.memory_space<vmem>>, vector<128x128xf32>
    %cst = arith.constant dense<0.000000e+00> : vector<256x128xf32>
    %2 = tpu.matmul %0, %1, %cst {dimension_numbers = #tpu.dot_dimension_numbers<[1], [0], [0], [1], [0, 0, 1, 1], [], []>} : vector<256x128xf32>, vector<128x128xf32>, vector<256x128xf32> -> vector<256x128xf32>
    %c0_3 = arith.constant 0 : index
    %c0_4 = arith.constant 0 : index
    %3 = vector.load %arg3[%c0_3, %c0_4] : memref<1x128xf32, #tpu.memory_space<vmem>>, vector<1x128xf32>
    %4 = vector.broadcast %3 : vector<1x128xf32> to vector<256x128xf32>
    %5 = arith.addf %2, %4 : vector<256x128xf32>
    %cst_5 = arith.constant 0.000000e+00 : f32
    %6 = vector.broadcast %cst_5 : f32 to vector<256x128xf32>
    %7 = arith.maximumf %5, %6 : vector<256x128xf32>
    %c0_6 = arith.constant 0 : index
    %c0_7 = arith.constant 0 : index
    %8 = vector.load %arg4[%c0_6, %c0_7] : memref<8x128xf32, #tpu.memory_space<vmem>>, vector<8x128xf32>
    %cst_8 = arith.constant dense<0.000000e+00> : vector<8x256xf32>
    %9 = tpu.matmul %8, %7, %cst_8 {dimension_numbers = #tpu.dot_dimension_numbers<[1], [1], [0], [0], [0, 0, 1, 0], [], []>} : vector<8x128xf32>, vector<256x128xf32>, vector<8x256xf32> -> vector<8x256xf32>
    %c0_9 = arith.constant 0 : index
    %c0_10 = arith.constant 0 : index
    %10 = vector.load %arg5[%c0_9, %c0_10] : memref<8x1xf32, #tpu.memory_space<vmem>>, vector<8x1xf32>
    %11 = vector.broadcast %10 : vector<8x1xf32> to vector<8x256xf32>
    %12 = arith.addf %9, %11 : vector<8x256xf32>
    %c0_11 = arith.constant 0 : index
    %c0_12 = arith.constant 0 : index
    %13 = vector.load %arg6[%c0_11, %c0_12] : memref<8x256xf32, #tpu.memory_space<vmem>>, vector<8x256xf32>
    tpu.vector_store %arg6[%c0_11, %c0_12], %12 {strides = array<i32>} : memref<8x256xf32, #tpu.memory_space<vmem>>, vector<8x256xf32>,
    return
  }
  func.func @transform_0(%arg0: i32) -> (i32, i32) {
    %c0_i32 = arith.constant 0 : i32
    %c0_i32_0 = arith.constant 0 : i32
    return %arg0, %c0_i32 : i32, i32
  }
  func.func @transform_1(%arg0: i32) -> (i32, i32) {
    %c0_i32 = arith.constant 0 : i32
    %c0_i32_0 = arith.constant 0 : i32
    %c0_i32_1 = arith.constant 0 : i32
    return %c0_i32, %c0_i32_0 : i32, i32
  }
  func.func @transform_2(%arg0: i32) -> (i32, i32) {
    %c0_i32 = arith.constant 0 : i32
    %c0_i32_0 = arith.constant 0 : i32
    %c0_i32_1 = arith.constant 0 : i32
    return %c0_i32, %c0_i32_0 : i32, i32
  }
  func.func @transform_3(%arg0: i32) -> (i32, i32) {
    %c0_i32 = arith.constant 0 : i32
    %c0_i32_0 = arith.constant 0 : i32
    %c0_i32_1 = arith.constant 0 : i32
    return %c0_i32, %c0_i32_0 : i32, i32
  }
  func.func @transform_4(%arg0: i32) -> (i32, i32) {
    %c0_i32 = arith.constant 0 : i32
    %c0_i32_0 = arith.constant 0 : i32
    %c0_i32_1 = arith.constant 0 : i32
    return %c0_i32, %c0_i32_0 : i32, i32
  }
  func.func @transform_5(%arg0: i32) -> (i32, i32) {
    %c0_i32 = arith.constant 0 : i32
    %c0_i32_0 = arith.constant 0 : i32
    return %c0_i32, %arg0 : i32, i32
  }
}

</mosaic_0001>

<llo_original>
// kernel: output_forward.1
$region0: #{output_forward.1}
  #allocation0 [shape = 'u32[]', space=smem, size = 0x4, offset = 0x4, fixed_abs, tag = 'smem constant byte address 0x4 - core index']
  #allocation1 [shape = 'u32[144,128]{1,0:T(1,128)}', space=vmem, size = 0x12000, scoped, tag = 'internal scratch']
  %s0 = inlined_call_operand.hbm [shape: f32[256,128], index: 0, kind: input, shape index: {}]
  %s1 = inlined_call_operand.hbm [shape: f32[128,128], index: 1, kind: input, shape index: {}]
  %s2 = inlined_call_operand.vmem [shape: f32[1,128], index: 2, kind: input, shape index: {}]
  %s3 = inlined_call_operand.vmem [shape: f32[8,128], index: 3, kind: input, shape index: {}]
  %s4 = inlined_call_operand.vmem [shape: f32[8,1], index: 4, kind: input, shape index: {}]
  %s5 = inlined_call_operand.vmem [shape: f32[8,256], index: 5, kind: output, shape index: {}]
  %s6 = sld [smem:[#allocation0]]
  $region38: #{output_forward.1} parent=0
    _
  %s8 = ssub.s32 1, %s6
  %s9 = scalar_select 0, %s8, %s6
  $region1: #{output_forward.1} parent=0
    #allocation2 [shape = 'u8[131072]{0}', space=vmem, size = 0x20000, scoped, tag = 'input window, operand 0, single buffered']
    #allocation3 [shape = 's32[1]{0}', space=sflag, size = 0x4, scoped, tag = 'scoped memory for output_forward.1']
    #allocation4 [shape = 'u8[65536]{0}', space=vmem, size = 0x10000, scoped, tag = 'input window, operand 1, single buffered']
    #allocation5 [shape = 's32[1]{0}', space=sflag, size = 0x4, scoped, tag = 'scoped memory for output_forward.1']
    %10 = vsyncpa [#allocation3], 0
    %11 = vsyncpa [#allocation5], 0
    // Predicated region
    $region2: #{output_forward.1} parent=1 // pred_check
      _
    $region3: #{output_forward.1} parent=1 // pred_check_branch
      %13 = sbr.rel (0) target = $region5
    $region4: #{output_forward.1} parent=1 // pred_region
      %s15 = ssub.s32 4096, 4096
      %16 = vsyncadd [#allocation3], %s15
      %s17 = sshll.u32 [#allocation2], 4
      %s18 = int_to_ptr.vmem [resolvable:$true] %s17
      %23 = dma.hbm_to_vmem [thread:$0]  %s0, 4096, %s18, [#allocation3], 128, 128, 8
    $region5: #{output_forward.1} parent=1 // pred_fallthru
      _
    // Predicated region
    $region6: #{output_forward.1} parent=1 // pred_check
      _
    $region7: #{output_forward.1} parent=1 // pred_check_branch
      %25 = sbr.rel (0) target = $region9
    $region8: #{output_forward.1} parent=1 // pred_region
      %s27 = ssub.s32 2048, 2048
      %28 = vsyncadd [#allocation5], %s27
      %s29 = sshll.u32 [#allocation4], 4
      %s30 = int_to_ptr.vmem [resolvable:$true] %s29
      %35 = dma.hbm_to_vmem [thread:$0]  %s1, 2048, %s30, [#allocation5], 128, 128, 8
    $region9: #{output_forward.1} parent=1 // pred_fallthru
      _
    // Predicated region
    $region10: #{output_forward.1} parent=1 // pred_check
      _
    $region11: #{output_forward.1} parent=1 // pred_check_branch
      %37 = sbr.rel (0) target = $region13
    $region12: #{output_forward.1} parent=1 // pred_region
      _
    $region13: #{output_forward.1} parent=1 // pred_fallthru
      _
    // Predicated region
    $region14: #{output_forward.1} parent=1 // pred_check
      _
    $region15: #{output_forward.1} parent=1 // pred_check_branch
      %39 = sbr.rel (0) target = $region17
    $region16: #{output_forward.1} parent=1 // pred_region
      _
    $region17: #{output_forward.1} parent=1 // pred_fallthru
      _
    // Predicated region
    $region18: #{output_forward.1} parent=1 // pred_check
      _
    $region19: #{output_forward.1} parent=1 // pred_check_branch
      %41 = sbr.rel (0) target = $region21
    $region20: #{output_forward.1} parent=1 // pred_region
      _
    $region21: #{output_forward.1} parent=1 // pred_fallthru
      _
    // Predicated region
    $region22: #{output_forward.1} parent=1 // pred_check
      _
    $region23: #{output_forward.1} parent=1 // pred_check_branch
      %43 = sbr.rel (0) target = $region25
    $region24: #{output_forward.1} parent=1 // pred_region
      %44 = dma.done [#allocation3], 4096
    $region25: #{output_forward.1} parent=1 // pred_fallthru
      _
    // Predicated region
    $region26: #{output_forward.1} parent=1 // pred_check
      _
    $region27: #{output_forward.1} parent=1 // pred_check_branch
      %46 = sbr.rel (0) target = $region29
    $region28: #{output_forward.1} parent=1 // pred_region
      %47 = dma.done [#allocation5], 2048
    $region29: #{output_forward.1} parent=1 // pred_fallthru
      _
    %v48 = vld [vmem:[#allocation2] sm:$0xff]
    %v49 = vld [vmem:[#allocation2 + $0x8] sm:$0xff]
    %v50 = vld [vmem:[#allocation2 + $0x10] sm:$0xff]
    %v51 = vld [vmem:[#allocation2 + $0x18] sm:$0xff]
    %v52 = vld [vmem:[#allocation2 + $0x20] sm:$0xff]
    %v53 = vld [vmem:[#allocation2 + $0x28] sm:$0xff]
    %v54 = vld [vmem:[#allocation2 + $0x30] sm:$0xff]
    %v55 = vld [vmem:[#allocation2 + $0x38] sm:$0xff]
    %v56 = vld [vmem:[#allocation2 + $0x40] sm:$0xff]
    %v57 = vld [vmem:[#allocation2 + $0x48] sm:$0xff]
    %v58 = vld [vmem:[#allocation2 + $0x50] sm:$0xff]
    %v59 = vld [vmem:[#allocation2 + $0x58] sm:$0xff]
    %v60 = vld [vmem:[#allocation2 + $0x60] sm:$0xff]
    %v61 = vld [vmem:[#allocation2 + $0x68] sm:$0xff]
    %v62 = vld [vmem:[#allocation2 + $0x70] sm:$0xff]
    %v63 = vld [vmem:[#allocation2 + $0x78] sm:$0xff]
    %v64 = vld [vmem:[#allocation2 + $0x80] sm:$0xff]
    %v65 = vld [vmem:[#allocation2 + $0x88] sm:$0xff]
    %v66 = vld [vmem:[#allocation2 + $0x90] sm:$0xff]
    %v67 = vld [vmem:[#allocation2 + $0x98] sm:$0xff]
    %v68 = vld [vmem:[#allocation2 + $0xa0] sm:$0xff]
    %v69 = vld [vmem:[#allocation2 + $0xa8] sm:$0xff]
    %v70 = vld [vmem:[#allocation2 + $0xb0] sm:$0xff]
    %v71 = vld [vmem:[#allocation2 + $0xb8] sm:$0xff]
    %v72 = vld [vmem:[#allocation2 + $0xc0] sm:$0xff]
    %v73 = vld [vmem:[#allocation2 + $0xc8] sm:$0xff]
    %v74 = vld [vmem:[#allocation2 + $0xd0] sm:$0xff]
    %v75 = vld [vmem:[#allocation2 + $0xd8] sm:$0xff]
    %v76 = vld [vmem:[#allocation2 + $0xe0] sm:$0xff]
    %v77 = vld [vmem:[#allocation2 + $0xe8] sm:$0xff]
    %v78 = vld [vmem:[#allocation2 + $0xf0] sm:$0xff]
    %v79 = vld [vmem:[#allocation2 + $0xf8] sm:$0xff]
    %v80 = vld [vmem:[#allocation4] sm:$0xff]
    %v81 = vld [vmem:[#allocation4 + $0x8] sm:$0xff]
    %v82 = vld [vmem:[#allocation4 + $0x10] sm:$0xff]
    %v83 = vld [vmem:[#allocation4 + $0x18] sm:$0xff]
    %v84 = vld [vmem:[#allocation4 + $0x20] sm:$0xff]
    %v85 = vld [vmem:[#allocation4 + $0x28] sm:$0xff]
    %v86 = vld [vmem:[#allocation4 + $0x30] sm:$0xff]
    %v87 = vld [vmem:[#allocation4 + $0x38] sm:$0xff]
    %v88 = vld [vmem:[#allocation4 + $0x40] sm:$0xff]
    %v89 = vld [vmem:[#allocation4 + $0x48] sm:$0xff]
    %v90 = vld [vmem:[#allocation4 + $0x50] sm:$0xff]
    %v91 = vld [vmem:[#allocation4 + $0x58] sm:$0xff]
    %v92 = vld [vmem:[#allocation4 + $0x60] sm:$0xff]
    %v93 = vld [vmem:[#allocation4 + $0x68] sm:$0xff]
    %v94 = vld [vmem:[#allocation4 + $0x70] sm:$0xff]
    %v95 = vld [vmem:[#allocation4 + $0x78] sm:$0xff]
    %v96 = vld [vmem:[%s2] sm:$0x1]
    %v98 = vlaneseq
    %v99 = vshrl.u32 %v98, 7
    %v100 = vsub.s32 0, %v99
    %v101 = vrot.slane %v96, %v100
    %103 = vmatprep.subr.mxu0 0.0
    %104 = vmatpush1.msra.mxu0 %v80
    %105 = vmatprep.subr.mxu0 0.0
    %106 = vmatpush1.msra.mxu0 %v81
    %107 = vmatprep.subr.mxu0 0.0
    %108 = vmatpush1.msra.mxu0 %v82
    %109 = vmatprep.subr.mxu0 0.0
    %110 = vmatpush1.msra.mxu0 %v83
    %111 = vmatprep.subr.mxu0 0.0
    %112 = vmatpush1.msra.mxu0 %v84
    %113 = vmatprep.subr.mxu0 0.0
    %114 = vmatpush1.msra.mxu0 %v85
    %115 = vmatprep.subr.mxu0 0.0
    %116 = vmatpush1.msra.mxu0 %v86
    %117 = vmatprep.subr.mxu0 0.0
    %118 = vmatpush1.msra.mxu0 %v87
    %119 = vmatprep.subr.mxu0 0.0
    %120 = vmatpush1.msra.mxu0 %v88
    %121 = vmatprep.subr.mxu0 0.0
    %122 = vmatpush1.msra.mxu0 %v89
    %123 = vmatprep.subr.mxu0 0.0
    %124 = vmatpush1.msra.mxu0 %v90
    %125 = vmatprep.subr.mxu0 0.0
    %126 = vmatpush1.msra.mxu0 %v91
    %127 = vmatprep.subr.mxu0 0.0
    %128 = vmatpush1.msra.mxu0 %v92
    %129 = vmatprep.subr.mxu0 0.0
    %130 = vmatpush1.msra.mxu0 %v93
    %131 = vmatprep.subr.mxu0 0.0
    %132 = vmatpush1.msra.mxu0 %v94
    %133 = vmatprep.subr.mxu0 0.0
    %134 = vmatpush1.msra.mxu0 %v95
    %135 = vmatprep.subr.mxu0 0.0
    %136 = vmatpush1.msra.mxu0 0.0
    %137 = vmatprep.subr.mxu0 0.0
    %138 = vmatpush1.msra.mxu0 0.0
    %139 = vmatprep.subr.mxu0 0.0
    %140 = vmatpush1.msra.mxu0 0.0
    %141 = vmatprep.subr.mxu0 0.0
    %142 = vmatpush1.msra.mxu0 0.0
    %143 = vmatprep.subr.mxu0 0.0
    %144 = vmatpush1.msra.mxu0 0.0
    %145 = vmatprep.subr.mxu0 0.0
    %146 = vmatpush1.msra.mxu0 0.0
    %147 = vmatprep.subr.mxu0 0.0
    %148 = vmatpush1.msra.mxu0 0.0
    %149 = vmatprep.subr.mxu0 0.0
    %150 = vmatpush1.msra.mxu0 0.0
    %151 = vmatprep.subr.mxu0 0.0
    %152 = vmatpush1.msra.mxu0 0.0
    %153 = vmatprep.subr.mxu0 0.0
    %154 = vmatpush1.msra.mxu0 0.0
    %155 = vmatprep.subr.mxu0 0.0
    %156 = vmatpush1.msra.mxu0 0.0
    %157 = vmatprep.subr.mxu0 0.0
    %158 = vmatpush1.msra.mxu0 0.0
    %159 = vmatprep.subr.mxu0 0.0
    %160 = vmatpush1.msra.mxu0 0.0
    %161 = vmatprep.subr.mxu0 0.0
    %162 = vmatpush1.msra.mxu0 0.0
    %163 = vmatprep.subr.mxu0 0.0
    %164 = vmatpush1.msra.mxu0 0.0
    %165 = vmatprep.subr.mxu0 0.0
    %166 = vmatpush1.msra.mxu0 0.0
    %167 = vmatprep.mubr.f32.mxu0 0.0
    %168 = vmatmul.mubr.f32.gmra.mrb[0].mxu0 %v48
    %v169 = vpop.f32.mrb[0].mxu0
    %v170 = vadd.f32 %v101, %v169
    %v171 = vpop.f32.mrb[0].mxu0
    %172 = vmatprep.mubr.f32.mxu0 0.0
    %173 = vmatmul.mubr.f32.gmra.mrb[0].mxu0 %v49
    %v174 = vpop.f32.mrb[0].mxu0
    %v175 = vadd.f32 %v101, %v174
    %v176 = vpop.f32.mrb[0].mxu0
    %177 = vmatprep.mubr.f32.mxu0 0.0
    %178 = vmatmul.mubr.f32.gmra.mrb[0].mxu0 %v50
    %v179 = vpop.f32.mrb[0].mxu0
    %v180 = vadd.f32 %v101, %v179
    %v181 = vpop.f32.mrb[0].mxu0
    %182 = vmatprep.mubr.f32.mxu0 0.0
    %183 = vmatmul.mubr.f32.gmra.mrb[0].mxu0 %v51
    %v184 = vpop.f32.mrb[0].mxu0
    %v185 = vadd.f32 %v101, %v184
    %v186 = vpop.f32.mrb[0].mxu0
    %187 = vmatprep.mubr.f32.mxu0 0.0
    %188 = vmatmul.mubr.f32.gmra.mrb[0].mxu0 %v52
    %v189 = vpop.f32.mrb[0].mxu0
    %v190 = vadd.f32 %v101, %v189
    %v191 = vpop.f32.mrb[0].mxu0
    %192 = vmatprep.mubr.f32.mxu0 0.0
    %193 = vmatmul.mubr.f32.gmra.mrb[0].mxu0 %v53
    %v194 = vpop.f32.mrb[0].mxu0
    %v195 = vadd.f32 %v101, %v194
    %v196 = vpop.f32.mrb[0].mxu0
    %197 = vmatprep.mubr.f32.mxu0 0.0
    %198 = vmatmul.mubr.f32.gmra.mrb[0].mxu0 %v54
    %v199 = vpop.f32.mrb[0].mxu0
    %v200 = vadd.f32 %v101, %v199
    %v201 = vpop.f32.mrb[0].mxu0
    %202 = vmatprep.mubr.f32.mxu0 0.0
    %203 = vmatmul.mubr.f32.gmra.mrb[0].mxu0 %v55
    %v204 = vpop.f32.mrb[0].mxu0
    %v205 = vadd.f32 %v101, %v204
    %v206 = vpop.f32.mrb[0].mxu0
    %207 = vmatprep.mubr.f32.mxu0 0.0
    %208 = vmatmul.mubr.f32.gmra.mrb[0].mxu0 %v56
    %v209 = vpop.f32.mrb[0].mxu0
    %v210 = vadd.f32 %v101, %v209
    %v211 = vpop.f32.mrb[0].mxu0
    %212 = vmatprep.mubr.f32.mxu0 0.0
    %213 = vmatmul.mubr.f32.gmra.mrb[0].mxu0 %v57
    %v214 = vpop.f32.mrb[0].mxu0
    %v215 = vadd.f32 %v101, %v214
    %v216 = vpop.f32.mrb[0].mxu0
    %217 = vmatprep.mubr.f32.mxu0 0.0
    %218 = vmatmul.mubr.f32.gmra.mrb[0].mxu0 %v58
    %v219 = vpop.f32.mrb[0].mxu0
    %v220 = vadd.f32 %v101, %v219
    %v221 = vpop.f32.mrb[0].mxu0
    %222 = vmatprep.mubr.f32.mxu0 0.0
    %223 = vmatmul.mubr.f32.gmra.mrb[0].mxu0 %v59
    %v224 = vpop.f32.mrb[0].mxu0
    %v225 = vadd.f32 %v101, %v224
    %v226 = vpop.f32.mrb[0].mxu0
    %227 = vmatprep.mubr.f32.mxu0 0.0
    %228 = vmatmul.mubr.f32.gmra.mrb[0].mxu0 %v60
    %v229 = vpop.f32.mrb[0].mxu0
    %v230 = vadd.f32 %v101, %v229
    %v231 = vpop.f32.mrb[0].mxu0
    %232 = vmatprep.mubr.f32.mxu0 0.0
    %233 = vmatmul.mubr.f32.gmra.mrb[0].mxu0 %v61
    %v234 = vpop.f32.mrb[0].mxu0
    %v235 = vadd.f32 %v101, %v234
    %v236 = vpop.f32.mrb[0].mxu0
    %237 = vmatprep.mubr.f32.mxu0 0.0
    %238 = vmatmul.mubr.f32.gmra.mrb[0].mxu0 %v62
    %v239 = vpop.f32.mrb[0].mxu0
    %v240 = vadd.f32 %v101, %v239
    %v241 = vpop.f32.mrb[0].mxu0
    %242 = vmatprep.mubr.f32.mxu0 0.0
    %243 = vmatmul.mubr.f32.gmra.mrb[0].mxu0 %v63
    %v244 = vpop.f32.mrb[0].mxu0
    %v245 = vadd.f32 %v101, %v244
    %v246 = vpop.f32.mrb[0].mxu0
    %247 = vmatprep.mubr.f32.mxu0 0.0
    %248 = vmatmul.mubr.f32.gmra.mrb[0].mxu0 %v64
    %v249 = vpop.f32.mrb[0].mxu0
    %v250 = vadd.f32 %v101, %v249
    %v251 = vpop.f32.mrb[0].mxu0
    %252 = vmatprep.mubr.f32.mxu0 0.0
    %253 = vmatmul.mubr.f32.gmra.mrb[0].mxu0 %v65
    %v254 = vpop.f32.mrb[0].mxu0
    %v255 = vadd.f32 %v101, %v254
    %v256 = vpop.f32.mrb[0].mxu0
    %257 = vmatprep.mubr.f32.mxu0 0.0
    %258 = vmatmul.mubr.f32.gmra.mrb[0].mxu0 %v66
    %v259 = vpop.f32.mrb[0].mxu0
    %v260 = vadd.f32 %v101, %v259
    %v261 = vpop.f32.mrb[0].mxu0
    %262 = vmatprep.mubr.f32.mxu0 0.0
    %263 = vmatmul.mubr.f32.gmra.mrb[0].mxu0 %v67
    %v264 = vpop.f32.mrb[0].mxu0
    %v265 = vadd.f32 %v101, %v264
    %v266 = vpop.f32.mrb[0].mxu0
    %267 = vmatprep.mubr.f32.mxu0 0.0
    %268 = vmatmul.mubr.f32.gmra.mrb[0].mxu0 %v68
    %v269 = vpop.f32.mrb[0].mxu0
    %v270 = vadd.f32 %v101, %v269
    %v271 = vpop.f32.mrb[0].mxu0
    %272 = vmatprep.mubr.f32.mxu0 0.0
    %273 = vmatmul.mubr.f32.gmra.mrb[0].mxu0 %v69
    %v274 = vpop.f32.mrb[0].mxu0
    %v275 = vadd.f32 %v101, %v274
    %v276 = vpop.f32.mrb[0].mxu0
    %277 = vmatprep.mubr.f32.mxu0 0.0
    %278 = vmatmul.mubr.f32.gmra.mrb[0].mxu0 %v70
    %v279 = vpop.f32.mrb[0].mxu0
    %v280 = vadd.f32 %v101, %v279
    %v281 = vpop.f32.mrb[0].mxu0
    %282 = vmatprep.mubr.f32.mxu0 0.0
    %283 = vmatmul.mubr.f32.gmra.mrb[0].mxu0 %v71
    %v284 = vpop.f32.mrb[0].mxu0
    %v285 = vadd.f32 %v101, %v284
    %v286 = vpop.f32.mrb[0].mxu0
    %287 = vmatprep.mubr.f32.mxu0 0.0
    %288 = vmatmul.mubr.f32.gmra.mrb[0].mxu0 %v72
    %v289 = vpop.f32.mrb[0].mxu0
    %v290 = vadd.f32 %v101, %v289
    %v291 = vpop.f32.mrb[0].mxu0
    %292 = vmatprep.mubr.f32.mxu0 0.0
    %293 = vmatmul.mubr.f32.gmra.mrb[0].mxu0 %v73
    %v294 = vpop.f32.mrb[0].mxu0
    %v295 = vadd.f32 %v101, %v294
    %v296 = vpop.f32.mrb[0].mxu0
    %297 = vmatprep.mubr.f32.mxu0 0.0
    %298 = vmatmul.mubr.f32.gmra.mrb[0].mxu0 %v74
    %v299 = vpop.f32.mrb[0].mxu0
    %v300 = vadd.f32 %v101, %v299
    %v301 = vpop.f32.mrb[0].mxu0
    %302 = vmatprep.mubr.f32.mxu0 0.0
    %303 = vmatmul.mubr.f32.gmra.mrb[0].mxu0 %v75
    %v304 = vpop.f32.mrb[0].mxu0
    %v305 = vadd.f32 %v101, %v304
    %v306 = vpop.f32.mrb[0].mxu0
    %307 = vmatprep.mubr.f32.mxu0 0.0
    %308 = vmatmul.mubr.f32.gmra.mrb[0].mxu0 %v76
    %v309 = vpop.f32.mrb[0].mxu0
    %v310 = vadd.f32 %v101, %v309
    %v311 = vpop.f32.mrb[0].mxu0
    %312 = vmatprep.mubr.f32.mxu0 0.0
    %313 = vmatmul.mubr.f32.gmra.mrb[0].mxu0 %v77
    %v314 = vpop.f32.mrb[0].mxu0
    %v315 = vadd.f32 %v101, %v314
    %v316 = vpop.f32.mrb[0].mxu0
    %317 = vmatprep.mubr.f32.mxu0 0.0
    %318 = vmatmul.mubr.f32.gmra.mrb[0].mxu0 %v78
    %v319 = vpop.f32.mrb[0].mxu0
    %v320 = vadd.f32 %v101, %v319
    %v321 = vpop.f32.mrb[0].mxu0
    %322 = vmatprep.mubr.f32.mxu0 0.0
    %323 = vmatmul.mubr.f32.gmra.mrb[0].mxu0 %v79
    %v324 = vpop.f32.mrb[0].mxu0
    %v325 = vadd.f32 %v101, %v324
    %v326 = vpop.f32.mrb[0].mxu0
    %327 = vdwg.mxu0
    %v328 = vmax.f32 %v170, 0.0
    %v329 = vmax.f32 %v175, 0.0
    %v330 = vmax.f32 %v180, 0.0
    %v331 = vmax.f32 %v185, 0.0
    %v332 = vmax.f32 %v190, 0.0
    %v333 = vmax.f32 %v195, 0.0
    %v334 = vmax.f32 %v200, 0.0
    %v335 = vmax.f32 %v205, 0.0
    %v336 = vmax.f32 %v210, 0.0
    %v337 = vmax.f32 %v215, 0.0
    %v338 = vmax.f32 %v220, 0.0
    %v339 = vmax.f32 %v225, 0.0
    %v340 = vmax.f32 %v230, 0.0
    %v341 = vmax.f32 %v235, 0.0
    %v342 = vmax.f32 %v240, 0.0
    %v343 = vmax.f32 %v245, 0.0
    %v344 = vmax.f32 %v250, 0.0
    %v345 = vmax.f32 %v255, 0.0
    %v346 = vmax.f32 %v260, 0.0
    %v347 = vmax.f32 %v265, 0.0
    %v348 = vmax.f32 %v270, 0.0
    %v349 = vmax.f32 %v275, 0.0
    %v350 = vmax.f32 %v280, 0.0
    %v351 = vmax.f32 %v285, 0.0
    %v352 = vmax.f32 %v290, 0.0
    %v353 = vmax.f32 %v295, 0.0
    %v354 = vmax.f32 %v300, 0.0
    %v355 = vmax.f32 %v305, 0.0
    %v356 = vmax.f32 %v310, 0.0
    %v357 = vmax.f32 %v315, 0.0
    %v358 = vmax.f32 %v320, 0.0
    %v359 = vmax.f32 %v325, 0.0
    %v360 = vld [vmem:[%s3] sm:$0xff]
    %v361 = vld [vmem:[%s4] sm:$0xff]
    %363 = vset.pattern.permute.xlu0 0
    %364 = vperm.xlu0 %363, %v361
    %v365 = vpop.permute.xlu0 %364
    %367 = vmatprep.subr.mxu0 0.0
    %368 = vmatpush1.xpose.msra.mxu0 %v328
    %369 = vmatprep.subr.mxu0 0.0
    %370 = vmatpush1.xpose.msra.mxu0 %v329
    %371 = vmatprep.subr.mxu0 0.0
    %372 = vmatpush1.xpose.msra.mxu0 %v330
    %373 = vmatprep.subr.mxu0 0.0
    %374 = vmatpush1.xpose.msra.mxu0 %v331
    %375 = vmatprep.subr.mxu0 0.0
    %376 = vmatpush1.xpose.msra.mxu0 %v332
    %377 = vmatprep.subr.mxu0 0.0
    %378 = vmatpush1.xpose.msra.mxu0 %v333
    %379 = vmatprep.subr.mxu0 0.0
    %380 = vmatpush1.xpose.msra.mxu0 %v334
    %381 = vmatprep.subr.mxu0 0.0
    %382 = vmatpush1.xpose.msra.mxu0 %v335
    %383 = vmatprep.subr.mxu0 0.0
    %384 = vmatpush1.xpose.msra.mxu0 %v336
    %385 = vmatprep.subr.mxu0 0.0
    %386 = vmatpush1.xpose.msra.mxu0 %v337
    %387 = vmatprep.subr.mxu0 0.0
    %388 = vmatpush1.xpose.msra.mxu0 %v338
    %389 = vmatprep.subr.mxu0 0.0
    %390 = vmatpush1.xpose.msra.mxu0 %v339
    %391 = vmatprep.subr.mxu0 0.0
    %392 = vmatpush1.xpose.msra.mxu0 %v340
    %393 = vmatprep.subr.mxu0 0.0
    %394 = vmatpush1.xpose.msra.mxu0 %v341
    %395 = vmatprep.subr.mxu0 0.0
    %396 = vmatpush1.xpose.msra.mxu0 %v342
    %397 = vmatprep.subr.mxu0 0.0
    %398 = vmatpush1.xpose.msra.mxu0 %v343
    %399 = vmatprep.subr.mxu0 0.0
    %400 = vmatpush1.xpose.msra.mxu0 %v344
    %401 = vmatprep.subr.mxu0 0.0
    %402 = vmatpush1.xpose.msra.mxu0 %v345
    %403 = vmatprep.subr.mxu0 0.0
    %404 = vmatpush1.xpose.msra.mxu0 %v346
    %405 = vmatprep.subr.mxu0 0.0
    %406 = vmatpush1.xpose.msra.mxu0 %v347
    %407 = vmatprep.subr.mxu0 0.0
    %408 = vmatpush1.xpose.msra.mxu0 %v348
    %409 = vmatprep.subr.mxu0 0.0
    %410 = vmatpush1.xpose.msra.mxu0 %v349
    %411 = vmatprep.subr.mxu0 0.0
    %412 = vmatpush1.xpose.msra.mxu0 %v350
    %413 = vmatprep.subr.mxu0 0.0
    %414 = vmatpush1.xpose.msra.mxu0 %v351
    %415 = vmatprep.subr.mxu0 0.0
    %416 = vmatpush1.xpose.msra.mxu0 %v352
    %417 = vmatprep.subr.mxu0 0.0
    %418 = vmatpush1.xpose.msra.mxu0 %v353
    %419 = vmatprep.subr.mxu0 0.0
    %420 = vmatpush1.xpose.msra.mxu0 %v354
    %421 = vmatprep.subr.mxu0 0.0
    %422 = vmatpush1.xpose.msra.mxu0 %v355
    %423 = vmatprep.subr.mxu0 0.0
    %424 = vmatpush1.xpose.msra.mxu0 %v356
    %425 = vmatprep.subr.mxu0 0.0
    %426 = vmatpush1.xpose.msra.mxu0 %v357
    %427 = vmatprep.subr.mxu0 0.0
    %428 = vmatpush1.xpose.msra.mxu0 %v358
    %429 = vmatprep.subr.mxu0 0.0
    %430 = vmatpush1.xpose.msra.mxu0 %v359
    %431 = vmatprep.mubr.f32.mxu0 0.0
    %432 = vmatmul.mubr.f32.gmra.mrb[0].mxu0 %v360
    %v433 = vpop.f32.mrb[0].mxu0
    %v434 = vadd.f32 %v365, %v433
    %v435 = vpop.f32.mrb[0].mxu0
    %v436 = vadd.f32 %v365, %v435
    %437 = vdwg.mxu0
    %438 = vst [vmem:[%s5] sm:$0xff] %v434
    %439 = vst [vmem:[%s5 + $0x8] sm:$0xff] %v436
    // Predicated region
    $region30: #{output_forward.1} parent=1 // pred_check
      _
    $region31: #{output_forward.1} parent=1 // pred_check_branch
      %441 = sbr.rel (0) target = $region33
    $region32: #{output_forward.1} parent=1 // pred_region
      _
    $region33: #{output_forward.1} parent=1 // pred_fallthru
      _
    // Predicated region
    $region34: #{output_forward.1} parent=1 // pred_check
      _
    $region35: #{output_forward.1} parent=1 // pred_check_branch
      %443 = sbr.rel (0) target = $region37
    $region36: #{output_forward.1} parent=1 // pred_region
      _
    $region37: #{output_forward.1} parent=1 // pred_fallthru
      _
    %444 = vsyncpa [#allocation3], 1
    %445 = vsyncpa [#allocation5], 1

</llo_original>
